<compile_context>
chip_gen: v5e
topology: v5e:2x2
jax: 0.10.0
libtpu: 0.0.40
codegen_flags: <defaults>
</compile_context>

<pallas_src>
import functools

import jax
import jax.numpy as jnp
from jax.experimental import pallas as pl
from jax.experimental.pallas import tpu as pltpu


def _mlp_adj_kernel(x_ref,
                    w1_ref, b1_ref,
                    w2_ref, b2_ref,
                    w3_ref, b3_ref,
                    w4_ref, b4_ref,
                    o_ref):
    """Fused 4-layer pointwise MLP: (relu . affine)^3 then tanh/2.

    x_ref:  (C0, TN)        one tile of points (lanes) x input channels (f32)
    wK_ref: (C_k, C_{k-1})  BN-folded conv weights (bf16)
    bK_ref: (C_k, 1)        BN-folded bias (f32)
    o_ref:  (dim, TN)       output tile (out_dtype)
    """
    # Cast to bf16 inside the kernel: x travels HBM->VMEM as f32 exactly once.
    h = x_ref[...].astype(jnp.bfloat16)

    h = jnp.dot(w1_ref[...], h, preferred_element_type=jnp.float32) + b1_ref[...]
    h = jnp.maximum(h, 0.0).astype(jnp.bfloat16)

    h = jnp.dot(w2_ref[...], h, preferred_element_type=jnp.float32) + b2_ref[...]
    h = jnp.maximum(h, 0.0).astype(jnp.bfloat16)

    h = jnp.dot(w3_ref[...], h, preferred_element_type=jnp.float32) + b3_ref[...]
    h = jnp.maximum(h, 0.0).astype(jnp.bfloat16)

    h = jnp.dot(w4_ref[...], h, preferred_element_type=jnp.float32) + b4_ref[...]
    o_ref[...] = (jnp.tanh(h) * 0.5).astype(o_ref.dtype)


def _round_up(v, m):
    return ((v + m - 1) // m) * m


@functools.partial(jax.jit, static_argnames=("tn", "out_dtype"))
def mlp_adj_forward(x, params, *, tn=4096, out_dtype=jnp.float32):
    """x: (B, nlatent, N) float32  ->  (B, dim, N) out_dtype (NCW, like PyTorch)."""
    (w1, b1), (w2, b2), (w3, b3), (w4, b4) = params
    B, C0, N = x.shape
    dim = w4.shape[0]

    # Lane tile: 128-aligned, no larger than ceil(N/128)*128, default large so
    # per-grid-step overhead is amortized.
    tn_eff = min(_round_up(N, 128), _round_up(max(tn, 128), 128))
    # v7x megacore guard: make sure there are >= 2 "parallel" grid steps when
    # the problem allows it, so both TensorCores get work.
    while B * pl.cdiv(N, tn_eff) < 2 and tn_eff > 128:
        tn_eff = _round_up(max(tn_eff // 2, 128), 128)

    grid = (B, pl.cdiv(N, tn_eff))

    def x_map(b, n):
        return (b, 0, n)

    def full_map(b, n):
        return (0, 0)

    # Actual VMEM working set + ~6 MiB headroom (no blanket clamp).
    c1, c2, c3 = w1.shape[0], w2.shape[0], w3.shape[0]
    weight_bytes = sum(w.size * w.dtype.itemsize + b.size * b.dtype.itemsize
                      for (w, b) in ((w1, b1), (w2, b2), (w3, b3), (w4, b4)))
    out_itemsize = jnp.dtype(out_dtype).itemsize
    working_set = (
        2 * C0 * tn_eff * 4                     # double-buffered f32 x tile
        + 2 * dim * tn_eff * out_itemsize       # double-buffered output tile
        + 2 * weight_bytes                      # weights/biases (x2, conservative)
        + tn_eff * C0 * 2                       # bf16 copy of x tile
        + tn_eff * (c1 + c2 + c3 + dim) * 4     # f32 layer outputs
        + tn_eff * (c1 + c2 + c3) * 2           # bf16 relu'd activations
    )
    vmem_bytes = int(working_set + (6 << 20))

    out = pl.pallas_call(
        _mlp_adj_kernel,
        out_shape=jax.ShapeDtypeStruct((B, dim, N), out_dtype),
        grid_spec=pltpu.PrefetchScalarGridSpec(
            num_scalar_prefetch=0,
            grid=grid,
            in_specs=[
                pl.BlockSpec((None, C0, tn_eff), x_map),
                pl.BlockSpec(w1.shape, full_map),
                pl.BlockSpec(b1.shape, full_map),
                pl.BlockSpec(w2.shape, full_map),
                pl.BlockSpec(b2.shape, full_map),
                pl.BlockSpec(w3.shape, full_map),
                pl.BlockSpec(b3.shape, full_map),
                pl.BlockSpec(w4.shape, full_map),
                pl.BlockSpec(b4.shape, full_map),
            ],
            out_specs=pl.BlockSpec((None, dim, tn_eff), x_map),
        ),
        compiler_params=pltpu.CompilerParams(
            dimension_semantics=("parallel", "parallel"),
            vmem_limit_bytes=vmem_bytes),
    )(x, w1, b1, w2, b2, w3, b3, w4, b4)
    return out


def _fold_bn(w, b, gamma, beta, mean, var, eps=1e-5):
    """Fold Conv1d(k=1) weight (C_out, C_in) + BatchNorm (inference running
    stats) into one affine layer: bf16 weight (C_out, C_in), f32 bias (C_out, 1)."""
    scale = gamma / jnp.sqrt(var + eps)
    w_eff = (w * scale[:, None]).astype(jnp.bfloat16)     # (C_out, C_in) bf16
    b_eff = (scale * (b - mean) + beta)[:, None]          # (C_out, 1)   f32
    return w_eff, b_eff


def make_params(nlatent=128, dim=2, seed=0):
    """Deterministic synthetic parameters with the same shapes as mlpAdj."""
    key = jax.random.PRNGKey(seed)
    dims = [nlatent, nlatent, nlatent // 2, nlatent // 4, dim]
    params = []
    for li in range(4):
        c_in, c_out = dims[li], dims[li + 1]
        key, kw, kb, kg, kbe, km, kv = jax.random.split(key, 7)
        w = jax.random.normal(kw, (c_out, c_in), jnp.float32) * (1.0 / jnp.sqrt(c_in))
        b = jax.random.normal(kb, (c_out,), jnp.float32) * 0.1
        if li < 3:
            # BatchNorm1d params + running stats (inference semantics).
            gamma = 1.0 + 0.1 * jax.random.normal(kg, (c_out,), jnp.float32)
            beta = 0.1 * jax.random.normal(kbe, (c_out,), jnp.float32)
            mean = 0.1 * jax.random.normal(km, (c_out,), jnp.float32)
            var = 1.0 + 0.1 * jax.random.uniform(kv, (c_out,), jnp.float32)
        else:
            # conv4 has no BN: identity fold.
            gamma = jnp.ones((c_out,), jnp.float32)
            beta = jnp.zeros((c_out,), jnp.float32)
            mean = jnp.zeros((c_out,), jnp.float32)
            var = jnp.ones((c_out,), jnp.float32)
        params.append(_fold_bn(w, b, gamma, beta, mean, var))
    return tuple(params)


def _reference(x, params):
    """Plain-JAX reference doing the same bf16-weight / f32-accumulate math."""
    (w1, b1), (w2, b2), (w3, b3), (w4, b4) = params
    h = x.astype(jnp.bfloat16)                                   # (B, C0, N)

    def affine(w, b, h):
        y = jnp.einsum("oc,bcn->bon", w, h,
                       preferred_element_type=jnp.float32)
        return y + b[None]

    h = jnp.maximum(affine(w1, b1, h), 0.0).astype(jnp.bfloat16)
    h = jnp.maximum(affine(w2, b2, h), 0.0).astype(jnp.bfloat16)
    h = jnp.maximum(affine(w3, b3, h), 0.0).astype(jnp.bfloat16)
    return jnp.tanh(affine(w4, b4, h)) * 0.5                     # (B, dim, N)


if __name__ == "__main__":
    nlatent, dim = 128, 2
    B = 2

    params = make_params(nlatent=nlatent, dim=dim, seed=0)
    key = jax.random.PRNGKey(0)

    # Case 1: N an exact multiple of 128.
    k1, k2 = jax.random.split(key)
    x1 = jax.random.normal(k1, (B, nlatent, 256), jnp.float32)
    out1 = jax.block_until_ready(mlp_adj_forward(x1, params))
    ref1 = _reference(x1, params)
    assert out1.shape == (B, dim, 256), out1.shape
    assert jnp.allclose(out1, ref1, atol=1e-3, rtol=1e-3), float(
        jnp.max(jnp.abs(out1 - ref1)))

    # Case 2: ragged N (exercises the masked partial last lane-block).
    x2 = jax.random.normal(k2, (B, nlatent, 250), jnp.float32)
    out2 = jax.block_until_ready(mlp_adj_forward(x2, params))
    ref2 = _reference(x2, params)
    assert out2.shape == (B, dim, 250), out2.shape
    assert jnp.allclose(out2, ref2, atol=1e-3, rtol=1e-3), float(
        jnp.max(jnp.abs(out2 - ref2)))

    print("KERNEL_OK")
</pallas_src>

<mosaic_0001>
module attributes {stable_mosaic.version = 11 : i64} {
  func.func @_mlp_adj_kernel(%arg0: i32, %arg1: i32, %arg2: memref<1x128x256xf32, #tpu.memory_space<vmem>>, %arg3: memref<128x128xbf16, #tpu.memory_space<vmem>>, %arg4: memref<128x1xf32, #tpu.memory_space<vmem>>, %arg5: memref<64x128xbf16, #tpu.memory_space<vmem>>, %arg6: memref<64x1xf32, #tpu.memory_space<vmem>>, %arg7: memref<32x64xbf16, #tpu.memory_space<vmem>>, %arg8: memref<32x1xf32, #tpu.memory_space<vmem>>, %arg9: memref<2x32xbf16, #tpu.memory_space<vmem>>, %arg10: memref<2x1xf32, #tpu.memory_space<vmem>>, %arg11: memref<1x2x256xf32, #tpu.memory_space<vmem>>) attributes {dimension_semantics = [#tpu.dimension_semantics<parallel>, #tpu.dimension_semantics<parallel>], iteration_bounds = array<i64: 2, 1>, scalar_prefetch = 0 : i64, scratch_operands = 0 : i64, tpu.core_type = #tpu.core_type<tc>, window_params = [{transform_indices = @transform_0, window_bounds = array<i64: 1, 128, 256>}, {pipeline_mode = #tpu.pipeline_mode<synchronous>, transform_indices = @transform_1, window_bounds = array<i64: 128, 128>}, {pipeline_mode = #tpu.pipeline_mode<synchronous>, transform_indices = @transform_2, window_bounds = array<i64: 128, 1>}, {pipeline_mode = #tpu.pipeline_mode<synchronous>, transform_indices = @transform_3, window_bounds = array<i64: 64, 128>}, {pipeline_mode = #tpu.pipeline_mode<synchronous>, transform_indices = @transform_4, window_bounds = array<i64: 64, 1>}, {pipeline_mode = #tpu.pipeline_mode<synchronous>, transform_indices = @transform_5, window_bounds = array<i64: 32, 64>}, {pipeline_mode = #tpu.pipeline_mode<synchronous>, transform_indices = @transform_6, window_bounds = array<i64: 32, 1>}, {pipeline_mode = #tpu.pipeline_mode<synchronous>, transform_indices = @transform_7, window_bounds = array<i64: 2, 32>}, {pipeline_mode = #tpu.pipeline_mode<synchronous>, transform_indices = @transform_8, window_bounds = array<i64: 2, 1>}, {transform_indices = @transform_9, window_bounds = array<i64: 1, 2, 256>}]} {
    %c0 = arith.constant 0 : index
    %c0_0 = arith.constant 0 : index
    %c0_1 = arith.constant 0 : index
    %0 = vector.load %arg2[%c0, %c0_0, %c0_1] : memref<1x128x256xf32, #tpu.memory_space<vmem>>, vector<1x128x256xf32>
    %1 = vector.shape_cast %0 : vector<1x128x256xf32> to vector<128x256xf32>
    %2 = arith.truncf %1 : vector<128x256xf32> to vector<128x256xbf16>
    %c0_2 = arith.constant 0 : index
    %c0_3 = arith.constant 0 : index
    %3 = vector.load %arg3[%c0_2, %c0_3] : memref<128x128xbf16, #tpu.memory_space<vmem>>, vector<128x128xbf16>
    %cst = arith.constant dense<0.000000e+00> : vector<128x256xf32>
    %4 = tpu.matmul %3, %2, %cst {dimension_numbers = #tpu.dot_dimension_numbers<[1], [0], [0], [1], [0, 0, 1, 1], [], []>} : vector<128x128xbf16>, vector<128x256xbf16>, vector<128x256xf32> -> vector<128x256xf32>
    %c0_4 = arith.constant 0 : index
    %c0_5 = arith.constant 0 : index
    %5 = vector.load %arg4[%c0_4, %c0_5] : memref<128x1xf32, #tpu.memory_space<vmem>>, vector<128x1xf32>
    %6 = vector.broadcast %5 : vector<128x1xf32> to vector<128x256xf32>
    %7 = arith.addf %4, %6 : vector<128x256xf32>
    %cst_6 = arith.constant 0.000000e+00 : f32
    %8 = vector.broadcast %cst_6 : f32 to vector<128x256xf32>
    %9 = arith.maximumf %7, %8 : vector<128x256xf32>
    %10 = arith.truncf %9 : vector<128x256xf32> to vector<128x256xbf16>
    %c0_7 = arith.constant 0 : index
    %c0_8 = arith.constant 0 : index
    %11 = vector.load %arg5[%c0_7, %c0_8] : memref<64x128xbf16, #tpu.memory_space<vmem>>, vector<64x128xbf16>
    %cst_9 = arith.constant dense<0.000000e+00> : vector<64x256xf32>
    %12 = tpu.matmul %11, %10, %cst_9 {dimension_numbers = #tpu.dot_dimension_numbers<[1], [0], [0], [1], [0, 0, 1, 1], [], []>} : vector<64x128xbf16>, vector<128x256xbf16>, vector<64x256xf32> -> vector<64x256xf32>
    %c0_10 = arith.constant 0 : index
    %c0_11 = arith.constant 0 : index
    %13 = vector.load %arg6[%c0_10, %c0_11] : memref<64x1xf32, #tpu.memory_space<vmem>>, vector<64x1xf32>
    %14 = vector.broadcast %13 : vector<64x1xf32> to vector<64x256xf32>
    %15 = arith.addf %12, %14 : vector<64x256xf32>
    %cst_12 = arith.constant 0.000000e+00 : f32
    %16 = vector.broadcast %cst_12 : f32 to vector<64x256xf32>
    %17 = arith.maximumf %15, %16 : vector<64x256xf32>
    %18 = arith.truncf %17 : vector<64x256xf32> to vector<64x256xbf16>
    %c0_13 = arith.constant 0 : index
    %c0_14 = arith.constant 0 : index
    %19 = vector.load %arg7[%c0_13, %c0_14] : memref<32x64xbf16, #tpu.memory_space<vmem>>, vector<32x64xbf16>
    %cst_15 = arith.constant dense<0.000000e+00> : vector<32x256xf32>
    %20 = tpu.matmul %19, %18, %cst_15 {dimension_numbers = #tpu.dot_dimension_numbers<[1], [0], [0], [1], [0, 0, 1, 1], [], []>} : vector<32x64xbf16>, vector<64x256xbf16>, vector<32x256xf32> -> vector<32x256xf32>
    %c0_16 = arith.constant 0 : index
    %c0_17 = arith.constant 0 : index
    %21 = vector.load %arg8[%c0_16, %c0_17] : memref<32x1xf32, #tpu.memory_space<vmem>>, vector<32x1xf32>
    %22 = vector.broadcast %21 : vector<32x1xf32> to vector<32x256xf32>
    %23 = arith.addf %20, %22 : vector<32x256xf32>
    %cst_18 = arith.constant 0.000000e+00 : f32
    %24 = vector.broadcast %cst_18 : f32 to vector<32x256xf32>
    %25 = arith.maximumf %23, %24 : vector<32x256xf32>
    %26 = arith.truncf %25 : vector<32x256xf32> to vector<32x256xbf16>
    %c0_19 = arith.constant 0 : index
    %c0_20 = arith.constant 0 : index
    %27 = vector.load %arg9[%c0_19, %c0_20] : memref<2x32xbf16, #tpu.memory_space<vmem>>, vector<2x32xbf16>
    %cst_21 = arith.constant dense<0.000000e+00> : vector<2x256xf32>
    %28 = tpu.matmul %27, %26, %cst_21 {dimension_numbers = #tpu.dot_dimension_numbers<[1], [0], [0], [1], [0, 0, 1, 1], [], []>} : vector<2x32xbf16>, vector<32x256xbf16>, vector<2x256xf32> -> vector<2x256xf32>
    %c0_22 = arith.constant 0 : index
    %c0_23 = arith.constant 0 : index
    %29 = vector.load %arg10[%c0_22, %c0_23] : memref<2x1xf32, #tpu.memory_space<vmem>>, vector<2x1xf32>
    %30 = vector.broadcast %29 : vector<2x1xf32> to vector<2x256xf32>
    %31 = arith.addf %28, %30 : vector<2x256xf32>
    %32 = math.tanh %31 : vector<2x256xf32>
    %cst_24 = arith.constant 5.000000e-01 : f32
    %33 = vector.broadcast %cst_24 : f32 to vector<2x256xf32>
    %34 = arith.mulf %32, %33 : vector<2x256xf32>
    %c0_25 = arith.constant 0 : index
    %c0_26 = arith.constant 0 : index
    %c0_27 = arith.constant 0 : index
    %35 = vector.load %arg11[%c0_25, %c0_26, %c0_27] : memref<1x2x256xf32, #tpu.memory_space<vmem>>, vector<1x2x256xf32>
    %36 = vector.shape_cast %35 : vector<1x2x256xf32> to vector<2x256xf32>
    %37 = vector.shape_cast %34 : vector<2x256xf32> to vector<1x2x256xf32>
    tpu.vector_store %arg11[%c0_25, %c0_26, %c0_27], %37 {strides = array<i32>} : memref<1x2x256xf32, #tpu.memory_space<vmem>>, vector<1x2x256xf32>,
    return
  }
  func.func @transform_0(%arg0: i32, %arg1: i32) -> (i32, i32, i32) {
    %c0_i32 = arith.constant 0 : i32
    %c0_i32_0 = arith.constant 0 : i32
    return %arg0, %c0_i32, %arg1 : i32, i32, i32
  }
  func.func @transform_1(%arg0: i32, %arg1: i32) -> (i32, i32) {
    %c0_i32 = arith.constant 0 : i32
    %c0_i32_0 = arith.constant 0 : i32
    %c0_i32_1 = arith.constant 0 : i32
    return %c0_i32, %c0_i32_0 : i32, i32
  }
  func.func @transform_2(%arg0: i32, %arg1: i32) -> (i32, i32) {
    %c0_i32 = arith.constant 0 : i32
    %c0_i32_0 = arith.constant 0 : i32
    %c0_i32_1 = arith.constant 0 : i32
    return %c0_i32, %c0_i32_0 : i32, i32
  }
  func.func @transform_3(%arg0: i32, %arg1: i32) -> (i32, i32) {
    %c0_i32 = arith.constant 0 : i32
    %c0_i32_0 = arith.constant 0 : i32
    %c0_i32_1 = arith.constant 0 : i32
    return %c0_i32, %c0_i32_0 : i32, i32
  }
  func.func @transform_4(%arg0: i32, %arg1: i32) -> (i32, i32) {
    %c0_i32 = arith.constant 0 : i32
    %c0_i32_0 = arith.constant 0 : i32
    %c0_i32_1 = arith.constant 0 : i32
    return %c0_i32, %c0_i32_0 : i32, i32
  }
  func.func @transform_5(%arg0: i32, %arg1: i32) -> (i32, i32) {
    %c0_i32 = arith.constant 0 : i32
    %c0_i32_0 = arith.constant 0 : i32
    %c0_i32_1 = arith.constant 0 : i32
    return %c0_i32, %c0_i32_0 : i32, i32
  }
  func.func @transform_6(%arg0: i32, %arg1: i32) -> (i32, i32) {
    %c0_i32 = arith.constant 0 : i32
    %c0_i32_0 = arith.constant 0 : i32
    %c0_i32_1 = arith.constant 0 : i32
    return %c0_i32, %c0_i32_0 : i32, i32
  }
  func.func @transform_7(%arg0: i32, %arg1: i32) -> (i32, i32) {
    %c0_i32 = arith.constant 0 : i32
    %c0_i32_0 = arith.constant 0 : i32
    %c0_i32_1 = arith.constant 0 : i32
    return %c0_i32, %c0_i32_0 : i32, i32
  }
  func.func @transform_8(%arg0: i32, %arg1: i32) -> (i32, i32) {
    %c0_i32 = arith.constant 0 : i32
    %c0_i32_0 = arith.constant 0 : i32
    %c0_i32_1 = arith.constant 0 : i32
    return %c0_i32, %c0_i32_0 : i32, i32
  }
  func.func @transform_9(%arg0: i32, %arg1: i32) -> (i32, i32, i32) {
    %c0_i32 = arith.constant 0 : i32
    %c0_i32_0 = arith.constant 0 : i32
    return %arg0, %c0_i32, %arg1 : i32, i32, i32
  }
}

</mosaic_0001>

<llo_original>
// kernel: mlp_adj_forward.1
$region0: #{mlp_adj_forward.1}
  #allocation0 [shape = 'u32[]', space=smem, size = 0x4, offset = 0x4, fixed_abs, tag = 'smem constant byte address 0x4 - core index']
  #allocation1 [shape = 'u32[72,128]{1,0:T(1,128)}', space=vmem, size = 0x9000, scoped, tag = 'internal scratch']
  %s0 = inlined_call_operand.hbm [shape: f32[2,128,256], index: 0, kind: input, shape index: {}]
  %s1 = inlined_call_operand.vmem [shape: bf16[128,128], index: 1, kind: input, shape index: {}]
  %s2 = inlined_call_operand.vmem [shape: f32[128,1], index: 2, kind: input, shape index: {}]
  %s3 = inlined_call_operand.vmem [shape: bf16[64,128], index: 3, kind: input, shape index: {}]
  %s4 = inlined_call_operand.vmem [shape: f32[64,1], index: 4, kind: input, shape index: {}]
  %s5 = inlined_call_operand.vmem [shape: bf16[32,64], index: 5, kind: input, shape index: {}]
  %s6 = inlined_call_operand.vmem [shape: f32[32,1], index: 6, kind: input, shape index: {}]
  %s7 = inlined_call_operand.vmem [shape: bf16[2,32], index: 7, kind: input, shape index: {}]
  %s8 = inlined_call_operand.vmem [shape: f32[2,1], index: 8, kind: input, shape index: {}]
  %s9 = inlined_call_operand.hbm [shape: f32[2,2,256], index: 9, kind: output, shape index: {}]
  %s10 = sld [smem:[#allocation0]]
  $region73: #{mlp_adj_forward.1} parent=0
    _
  %s12 = ssub.s32 1, %s10
  %s13 = scalar_select 0, %s12, %s10
  $region1: #{mlp_adj_forward.1} parent=0
    #allocation2 [shape = 'u8[262144]{0}', space=vmem, size = 0x40000, scoped, tag = 'input window, operand 0']
    #allocation3 [shape = 's32[2]{0}', space=sflag, size = 0x8, scoped, tag = 'scoped memory for mlp_adj_forward.1']
    #allocation4 [shape = 's32[2]{0}', space=sflag, size = 0x8, scoped, tag = 'scoped memory for mlp_adj_forward.1']
    #allocation5 [shape = 'u8[4096]{0}', space=vmem, size = 0x1000, scoped, tag = 'output window, operand 0']
    %14 = vsyncpa [#allocation3], 0
    %s15 = scalar_lea.sflag [#allocation3], 1
    %16 = vsyncpa %s15, 0
    %17 = vsyncpa [#allocation4], 0
    %s18 = scalar_lea.sflag [#allocation4], 1
    %19 = vsyncpa %s18, 0
    loop: start=0, step=1, limit=4
    $region2: #{mlp_adj_forward.1} parent=1 // loop_pre_header
      _
    $region3: #{mlp_adj_forward.1} parent=1 // loop_header
      %s21 = sphi 0, %s25
      %p22 = scmp.ge.s32.totalorder %s21, 4
      %s28 = sphi 0, %s40
      %s29 = sphi 0, %s36
      %s30 = sphi 0, %s28
      %s31 = sphi 0, %s29
      %s32 = sphi 0, %s30
      %s33 = sphi 0, %s31
      %s45 = sphi 0, %s47
      %s48 = sphi 0, %s45
      %s49 = sphi 0, %s48
      %s65 = sphi 0, %s49
      %s69 = sphi 0, %s69
      %s71 = sphi 0, %s69
      %s72 = sphi 0, %s71
      %s86 = sphi 0, %s72
      %s90 = sphi 0, %s90
      %s92 = sphi 0, %s90
      %s93 = sphi 0, %s92
      %s107 = sphi 0, %s93
      %s111 = sphi 0, %s111
      %s113 = sphi 0, %s111
      %s114 = sphi 0, %s113
      %s128 = sphi 0, %s114
      %s132 = sphi 0, %s132
      %s134 = sphi 0, %s132
      %s135 = sphi 0, %s134
      %s149 = sphi 0, %s135
      %s153 = sphi 0, %s153
      %s155 = sphi 0, %s153
      %s156 = sphi 0, %s155
      %s170 = sphi 0, %s156
      %s174 = sphi 0, %s174
      %s176 = sphi 0, %s174
      %s177 = sphi 0, %s176
      %s191 = sphi 0, %s177
      %s195 = sphi 0, %s195
      %s197 = sphi 0, %s195
      %s198 = sphi 0, %s197
      %s212 = sphi 0, %s198
      %s216 = sphi 0, %s216
      %s218 = sphi 0, %s216
      %s219 = sphi 0, %s218
      %s233 = sphi 0, %s219
      %s241 = sphi 0, %s243
      %s244 = sphi 0, %s241
      %s245 = sphi 0, %s244
      %s261 = sphi 0, %s245
    $region4: #{mlp_adj_forward.1} parent=1 // loop_header_branch
      %24 = sbr.rel (%p22) target = $region8
    $region5: #{mlp_adj_forward.1} parent=1 // loop_body
      %s26 = ssub.s32 %s21, 1
      %s27 = ssub.s32 %s21, 2
      %s34 = sadd.s32 1, %s29
      %p35 = scmp.ge.s32.totalorder %s34, 1
      %s36 = scalar_select %p35, 0, %s34
      %s37 = sadd.s32 1, %s28
      %s38 = scalar_select %p35, %s37, %s28
      %p39 = scmp.ge.s32.totalorder %s38, 2
      %s40 = scalar_select %p39, 0, %s38
      %s41 = ssub.s32 %s28, %s40
      %s42 = ssub.s32 %s29, %s36
      %s43 = sor.u32 %s41, %s42
      %p44 = scmp.eq.s32.totalorder %s43, 0
      %s46 = sadd.s32 %s45, 1
      %s47 = scalar_select %p44, %s45, %s46
      %p50 = pneg %p44
      %p51 = scmp.eq.s32.totalorder %s21, 1
      %p52 = por %p50, %p51
      %p53 = scmp.ne.s32.totalorder %s45, %s48
      %p54 = scmp.eq.s32.totalorder %s21, 0
      %p55 = por %p53, %p54
      %p56 = scmp.ne.s32.totalorder %s45, %s48
      %p57 = scmp.eq.s32.totalorder %s26, 1
      %p58 = por %p56, %p57
      %p59 = scmp.ne.s32.totalorder %s48, %s49
      %p60 = scmp.eq.s32.totalorder %s26, 0
      %p61 = por %p59, %p60
      %p62 = scmp.ne.s32.totalorder %s48, %s49
      %p63 = scmp.eq.s32.totalorder %s27, 1
      %p64 = por %p62, %p63
      %p66 = scmp.ne.s32.totalorder %s49, %s65
      %p67 = scmp.eq.s32.totalorder %s27, 0
      %p68 = por %p66, %p67
      %s70 = sadd.s32 %s69, 1
      %p73 = scmp.eq.s32.totalorder %s21, 1
      %p74 = scmp.ne.s32.totalorder %s69, %s71
      %p75 = scmp.eq.s32.totalorder %s21, 0
      %p76 = por %p74, %p75
      %p77 = scmp.ne.s32.totalorder %s69, %s71
      %p78 = scmp.eq.s32.totalorder %s26, 1
      %p79 = por %p77, %p78
      %p80 = scmp.ne.s32.totalorder %s71, %s72
      %p81 = scmp.eq.s32.totalorder %s26, 0
      %p82 = por %p80, %p81
      %p83 = scmp.ne.s32.totalorder %s71, %s72
      %p84 = scmp.eq.s32.totalorder %s27, 1
      %p85 = por %p83, %p84
      %p87 = scmp.ne.s32.totalorder %s72, %s86
      %p88 = scmp.eq.s32.totalorder %s27, 0
      %p89 = por %p87, %p88
      %s91 = sadd.s32 %s90, 1
      %p94 = scmp.eq.s32.totalorder %s21, 1
      %p95 = scmp.ne.s32.totalorder %s90, %s92
      %p96 = scmp.eq.s32.totalorder %s21, 0
      %p97 = por %p95, %p96
      %p98 = scmp.ne.s32.totalorder %s90, %s92
      %p99 = scmp.eq.s32.totalorder %s26, 1
      %p100 = por %p98, %p99
      %p101 = scmp.ne.s32.totalorder %s92, %s93
      %p102 = scmp.eq.s32.totalorder %s26, 0
      %p103 = por %p101, %p102
      %p104 = scmp.ne.s32.totalorder %s92, %s93
      %p105 = scmp.eq.s32.totalorder %s27, 1
      %p106 = por %p104, %p105
      %p108 = scmp.ne.s32.totalorder %s93, %s107
      %p109 = scmp.eq.s32.totalorder %s27, 0
      %p110 = por %p108, %p109
      %s112 = sadd.s32 %s111, 1
      %p115 = scmp.eq.s32.totalorder %s21, 1
      %p116 = scmp.ne.s32.totalorder %s111, %s113
      %p117 = scmp.eq.s32.totalorder %s21, 0
      %p118 = por %p116, %p117
      %p119 = scmp.ne.s32.totalorder %s111, %s113
      %p120 = scmp.eq.s32.totalorder %s26, 1
      %p121 = por %p119, %p120
      %p122 = scmp.ne.s32.totalorder %s113, %s114
      %p123 = scmp.eq.s32.totalorder %s26, 0
      %p124 = por %p122, %p123
      %p125 = scmp.ne.s32.totalorder %s113, %s114
      %p126 = scmp.eq.s32.totalorder %s27, 1
      %p127 = por %p125, %p126
      %p129 = scmp.ne.s32.totalorder %s114, %s128
      %p130 = scmp.eq.s32.totalorder %s27, 0
      %p131 = por %p129, %p130
      %s133 = sadd.s32 %s132, 1
      %p136 = scmp.eq.s32.totalorder %s21, 1
      %p137 = scmp.ne.s32.totalorder %s132, %s134
      %p138 = scmp.eq.s32.totalorder %s21, 0
      %p139 = por %p137, %p138
      %p140 = scmp.ne.s32.totalorder %s132, %s134
      %p141 = scmp.eq.s32.totalorder %s26, 1
      %p142 = por %p140, %p141
      %p143 = scmp.ne.s32.totalorder %s134, %s135
      %p144 = scmp.eq.s32.totalorder %s26, 0
      %p145 = por %p143, %p144
      %p146 = scmp.ne.s32.totalorder %s134, %s135
      %p147 = scmp.eq.s32.totalorder %s27, 1
      %p148 = por %p146, %p147
      %p150 = scmp.ne.s32.totalorder %s135, %s149
      %p151 = scmp.eq.s32.totalorder %s27, 0
      %p152 = por %p150, %p151
      %s154 = sadd.s32 %s153, 1
      %p157 = scmp.eq.s32.totalorder %s21, 1
      %p158 = scmp.ne.s32.totalorder %s153, %s155
      %p159 = scmp.eq.s32.totalorder %s21, 0
      %p160 = por %p158, %p159
      %p161 = scmp.ne.s32.totalorder %s153, %s155
      %p162 = scmp.eq.s32.totalorder %s26, 1
      %p163 = por %p161, %p162
      %p164 = scmp.ne.s32.totalorder %s155, %s156
      %p165 = scmp.eq.s32.totalorder %s26, 0
      %p166 = por %p164, %p165
      %p167 = scmp.ne.s32.totalorder %s155, %s156
      %p168 = scmp.eq.s32.totalorder %s27, 1
      %p169 = por %p167, %p168
      %p171 = scmp.ne.s32.totalorder %s156, %s170
      %p172 = scmp.eq.s32.totalorder %s27, 0
      %p173 = por %p171, %p172
      %s175 = sadd.s32 %s174, 1
      %p178 = scmp.eq.s32.totalorder %s21, 1
      %p179 = scmp.ne.s32.totalorder %s174, %s176
      %p180 = scmp.eq.s32.totalorder %s21, 0
      %p181 = por %p179, %p180
      %p182 = scmp.ne.s32.totalorder %s174, %s176
      %p183 = scmp.eq.s32.totalorder %s26, 1
      %p184 = por %p182, %p183
      %p185 = scmp.ne.s32.totalorder %s176, %s177
      %p186 = scmp.eq.s32.totalorder %s26, 0
      %p187 = por %p185, %p186
      %p188 = scmp.ne.s32.totalorder %s176, %s177
      %p189 = scmp.eq.s32.totalorder %s27, 1
      %p190 = por %p188, %p189
      %p192 = scmp.ne.s32.totalorder %s177, %s191
      %p193 = scmp.eq.s32.totalorder %s27, 0
      %p194 = por %p192, %p193
      %s196 = sadd.s32 %s195, 1
      %p199 = scmp.eq.s32.totalorder %s21, 1
      %p200 = scmp.ne.s32.totalorder %s195, %s197
      %p201 = scmp.eq.s32.totalorder %s21, 0
      %p202 = por %p200, %p201
      %p203 = scmp.ne.s32.totalorder %s195, %s197
      %p204 = scmp.eq.s32.totalorder %s26, 1
      %p205 = por %p203, %p204
      %p206 = scmp.ne.s32.totalorder %s197, %s198
      %p207 = scmp.eq.s32.totalorder %s26, 0
      %p208 = por %p206, %p207
      %p209 = scmp.ne.s32.totalorder %s197, %s198
      %p210 = scmp.eq.s32.totalorder %s27, 1
      %p211 = por %p209, %p210
      %p213 = scmp.ne.s32.totalorder %s198, %s212
      %p214 = scmp.eq.s32.totalorder %s27, 0
      %p215 = por %p213, %p214
      %s217 = sadd.s32 %s216, 1
      %p220 = scmp.eq.s32.totalorder %s21, 1
      %p221 = scmp.ne.s32.totalorder %s216, %s218
      %p222 = scmp.eq.s32.totalorder %s21, 0
      %p223 = por %p221, %p222
      %p224 = scmp.ne.s32.totalorder %s216, %s218
      %p225 = scmp.eq.s32.totalorder %s26, 1
      %p226 = por %p224, %p225
      %p227 = scmp.ne.s32.totalorder %s218, %s219
      %p228 = scmp.eq.s32.totalorder %s26, 0
      %p229 = por %p227, %p228
      %p230 = scmp.ne.s32.totalorder %s218, %s219
      %p231 = scmp.eq.s32.totalorder %s27, 1
      %p232 = por %p230, %p231
      %p234 = scmp.ne.s32.totalorder %s219, %s233
      %p235 = scmp.eq.s32.totalorder %s27, 0
      %p236 = por %p234, %p235
      %s237 = ssub.s32 %s28, %s40
      %s238 = ssub.s32 %s29, %s36
      %s239 = sor.u32 %s237, %s238
      %p240 = scmp.eq.s32.totalorder %s239, 0
      %s242 = sadd.s32 %s241, 1
      %s243 = scalar_select %p240, %s241, %s242
      %p246 = pneg %p240
      %p247 = scmp.eq.s32.totalorder %s21, 1
      %p248 = por %p246, %p247
      %p249 = scmp.ne.s32.totalorder %s241, %s244
      %p250 = scmp.eq.s32.totalorder %s21, 0
      %p251 = por %p249, %p250
      %p252 = scmp.ne.s32.totalorder %s241, %s244
      %p253 = scmp.eq.s32.totalorder %s26, 1
      %p254 = por %p252, %p253
      %p255 = scmp.ne.s32.totalorder %s244, %s245
      %p256 = scmp.eq.s32.totalorder %s26, 0
      %p257 = por %p255, %p256
      %p258 = scmp.ne.s32.totalorder %s244, %s245
      %p259 = scmp.eq.s32.totalorder %s27, 1
      %p260 = por %p258, %p259
      %p262 = scmp.ne.s32.totalorder %s245, %s261
      %p263 = scmp.eq.s32.totalorder %s27, 0
      %p264 = por %p262, %p263
      %p265 = scmp.le.s32.totalorder 1, %s21
      %p266 = scmp.lt.s32.totalorder %s21, 3
      %p267 = pnand %p265, %p266
      %p268 = pneg %p267
      // Predicated region
      $region9: #{mlp_adj_forward.1} parent=5 // pred_check
        _
      $region10: #{mlp_adj_forward.1} parent=5 // pred_check_branch
        %270 = sbr.rel (%p267) target = $region12
      $region11: #{mlp_adj_forward.1} parent=5 // pred_region
        %s271 = ssub.s32 %s21, 1
        // Predicated region
        $region13: #{mlp_adj_forward.1} parent=11 // pred_check
          %p272 = pneg %p82
        $region14: #{mlp_adj_forward.1} parent=11 // pred_check_branch
          %274 = sbr.rel (%p272) target = $region16
        $region15: #{mlp_adj_forward.1} parent=11 // pred_region
          _
        $region16: #{mlp_adj_forward.1} parent=11 // pred_fallthru
          _
        // Predicated region
        $region17: #{mlp_adj_forward.1} parent=11 // pred_check
          %p275 = pneg %p103
        $region18: #{mlp_adj_forward.1} parent=11 // pred_check_branch
          %277 = sbr.rel (%p275) target = $region20
        $region19: #{mlp_adj_forward.1} parent=11 // pred_region
          _
        $region20: #{mlp_adj_forward.1} parent=11 // pred_fallthru
          _
        // Predicated region
        $region21: #{mlp_adj_forward.1} parent=11 // pred_check
          %p278 = pneg %p124
        $region22: #{mlp_adj_forward.1} parent=11 // pred_check_branch
          %280 = sbr.rel (%p278) target = $region24
        $region23: #{mlp_adj_forward.1} parent=11 // pred_region
          _
        $region24: #{mlp_adj_forward.1} parent=11 // pred_fallthru
          _
        // Predicated region
        $region25: #{mlp_adj_forward.1} parent=11 // pred_check
          %p281 = pneg %p145
        $region26: #{mlp_adj_forward.1} parent=11 // pred_check_branch
          %283 = sbr.rel (%p281) target = $region28
        $region27: #{mlp_adj_forward.1} parent=11 // pred_region
          _
        $region28: #{mlp_adj_forward.1} parent=11 // pred_fallthru
          _
        // Predicated region
        $region29: #{mlp_adj_forward.1} parent=11 // pred_check
          %p284 = pneg %p166
        $region30: #{mlp_adj_forward.1} parent=11 // pred_check_branch
          %286 = sbr.rel (%p284) target = $region32
        $region31: #{mlp_adj_forward.1} parent=11 // pred_region
          _
        $region32: #{mlp_adj_forward.1} parent=11 // pred_fallthru
          _
        // Predicated region
        $region33: #{mlp_adj_forward.1} parent=11 // pred_check
          %p287 = pneg %p187
        $region34: #{mlp_adj_forward.1} parent=11 // pred_check_branch
          %289 = sbr.rel (%p287) target = $region36
        $region35: #{mlp_adj_forward.1} parent=11 // pred_region
          _
        $region36: #{mlp_adj_forward.1} parent=11 // pred_fallthru
          _
        // Predicated region
        $region37: #{mlp_adj_forward.1} parent=11 // pred_check
          %p290 = pneg %p208
        $region38: #{mlp_adj_forward.1} parent=11 // pred_check_branch
          %292 = sbr.rel (%p290) target = $region40
        $region39: #{mlp_adj_forward.1} parent=11 // pred_region
          _
        $region40: #{mlp_adj_forward.1} parent=11 // pred_fallthru
          _
        // Predicated region
        $region41: #{mlp_adj_forward.1} parent=11 // pred_check
          %p293 = pneg %p229
        $region42: #{mlp_adj_forward.1} parent=11 // pred_check_branch
          %295 = sbr.rel (%p293) target = $region44
        $region43: #{mlp_adj_forward.1} parent=11 // pred_region
          _
        $region44: #{mlp_adj_forward.1} parent=11 // pred_fallthru
          _
      $region12: #{mlp_adj_forward.1} parent=5 // pred_fallthru
        _
      %p296 = scmp.lt.s32.totalorder %s21, 2
      // Predicated region
      $region45: #{mlp_adj_forward.1} parent=5 // pred_check
        %p297 = pneg %p296
      $region46: #{mlp_adj_forward.1} parent=5 // pred_check_branch
        %299 = sbr.rel (%p297) target = $region48
      $region47: #{mlp_adj_forward.1} parent=5 // pred_region
        // Predicated region
        $region49: #{mlp_adj_forward.1} parent=47 // pred_check
          %p300 = pneg %p55
        $region50: #{mlp_adj_forward.1} parent=47 // pred_check_branch
          %302 = sbr.rel (%p300) target = $region52
        $region51: #{mlp_adj_forward.1} parent=47 // pred_region
          %s303 = sand.u32 %s45, 1
          %s304 = scalar_lea.sflag [#allocation3], %s303
          %s305 = sand.u32 %s45, 1
          %s306 = smul.addr %s305, 256
          %s307 = scalar_lea.vmem [#allocation2], %s306
          %s308 = smul.u32 2, %s29
          %310 = vsyncadd %s304, 0
          %s311 = smul.addr %s28, 32
          %s312 = sadd.s32 %s308, %s311
          %s313 = smul.addr %s312, 8
          %s314 = scalar_lea.hbm %s0, %s313
          %s315 = sshll.u32 %s314, 4
          %s316 = int_to_ptr.hbm [resolvable:$true] %s315
          %s317 = sshll.u32 %s307, 4
          %s318 = int_to_ptr.vmem [resolvable:$true] %s317
          %323 = dma.hbm_to_vmem [thread:$0]  %s316, 4096, %s318, %s304, 256, 256, 16
        $region52: #{mlp_adj_forward.1} parent=47 // pred_fallthru
          _
      $region48: #{mlp_adj_forward.1} parent=5 // pred_fallthru
        _
      %p324 = scmp.le.s32.totalorder 1, %s21
      %p325 = scmp.lt.s32.totalorder %s21, 3
      %p326 = pnand %p324, %p325
      %p327 = pneg %p326
      // Predicated region
      $region53: #{mlp_adj_forward.1} parent=5 // pred_check
        _
      $region54: #{mlp_adj_forward.1} parent=5 // pred_check_branch
        %329 = sbr.rel (%p326) target = $region56
      $region55: #{mlp_adj_forward.1} parent=5 // pred_region
        %s330 = ssub.s32 %s21, 1
        %s331 = sand.u32 %s48, 1
        %s332 = scalar_lea.sflag [#allocation3], %s331
        %s333 = sand.u32 %s48, 1
        %s334 = smul.addr %s333, 256
        %s335 = scalar_lea.vmem [#allocation2], %s334
        // Predicated region
        $region57: #{mlp_adj_forward.1} parent=55 // pred_check
          %p336 = pneg %p61
        $region58: #{mlp_adj_forward.1} parent=55 // pred_check_branch
          %338 = sbr.rel (%p336) target = $region60
        $region59: #{mlp_adj_forward.1} parent=55 // pred_region
          %340 = dma.done %s332, 4096
        $region60: #{mlp_adj_forward.1} parent=55 // pred_fallthru
          _
        %s341 = sand.u32 %s48, 1
        %s342 = scalar_lea.sflag [#allocation3], %s341
        %s343 = sand.u32 %s48, 1
        %s344 = smul.addr %s343, 256
        %s345 = scalar_lea.vmem [#allocation2], %s344
        %p346 = pneg %p61
        %p347 = pneg %p58
        %p348 = pneg %p82
        %p349 = pneg %p79
        %p350 = pneg %p103
        %p351 = pneg %p100
        %p352 = pneg %p124
        %p353 = pneg %p121
        %p354 = pneg %p145
        %p355 = pneg %p142
        %p356 = pneg %p166
        %p357 = pneg %p163
        %p358 = pneg %p187
        %p359 = pneg %p184
        %p360 = pneg %p208
        %p361 = pneg %p205
        %p362 = pneg %p229
        %p363 = pneg %p226
        %p364 = pneg %p257
        %p365 = pneg %p254
        %s366 = sand.u32 %s244, 1
        %s367 = scalar_lea.sflag [#allocation4], %s366
        %s368 = sand.u32 %s244, 1
        %s369 = smul.addr %s368, 4
        %s370 = scalar_lea.vmem [#allocation5], %s369
        %s371 = smul.u32 2, %s31
        %s372 = smul.u32 2, %s31
        %v374 = vld [vmem:[%s335] sm:$0xff]
        %v375 = vld [vmem:[%s335 + $0x8] sm:$0xff]
        %v376 = vld [vmem:[%s335 + $0x10] sm:$0xff]
        %v377 = vld [vmem:[%s335 + $0x18] sm:$0xff]
        %v378 = vld [vmem:[%s335 + $0x20] sm:$0xff]
        %v379 = vld [vmem:[%s335 + $0x28] sm:$0xff]
        %v380 = vld [vmem:[%s335 + $0x30] sm:$0xff]
        %v381 = vld [vmem:[%s335 + $0x38] sm:$0xff]
        %v382 = vld [vmem:[%s335 + $0x40] sm:$0xff]
        %v383 = vld [vmem:[%s335 + $0x48] sm:$0xff]
        %v384 = vld [vmem:[%s335 + $0x50] sm:$0xff]
        %v385 = vld [vmem:[%s335 + $0x58] sm:$0xff]
        %v386 = vld [vmem:[%s335 + $0x60] sm:$0xff]
        %v387 = vld [vmem:[%s335 + $0x68] sm:$0xff]
        %v388 = vld [vmem:[%s335 + $0x70] sm:$0xff]
        %v389 = vld [vmem:[%s335 + $0x78] sm:$0xff]
        %v390 = vld [vmem:[%s335 + $0x80] sm:$0xff]
        %v391 = vld [vmem:[%s335 + $0x88] sm:$0xff]
        %v392 = vld [vmem:[%s335 + $0x90] sm:$0xff]
        %v393 = vld [vmem:[%s335 + $0x98] sm:$0xff]
        %v394 = vld [vmem:[%s335 + $0xa0] sm:$0xff]
        %v395 = vld [vmem:[%s335 + $0xa8] sm:$0xff]
        %v396 = vld [vmem:[%s335 + $0xb0] sm:$0xff]
        %v397 = vld [vmem:[%s335 + $0xb8] sm:$0xff]
        %v398 = vld [vmem:[%s335 + $0xc0] sm:$0xff]
        %v399 = vld [vmem:[%s335 + $0xc8] sm:$0xff]
        %v400 = vld [vmem:[%s335 + $0xd0] sm:$0xff]
        %v401 = vld [vmem:[%s335 + $0xd8] sm:$0xff]
        %v402 = vld [vmem:[%s335 + $0xe0] sm:$0xff]
        %v403 = vld [vmem:[%s335 + $0xe8] sm:$0xff]
        %v404 = vld [vmem:[%s335 + $0xf0] sm:$0xff]
        %v405 = vld [vmem:[%s335 + $0xf8] sm:$0xff]
        %v406 = vpack.c.bf16 %v376, %v374
        %v407 = vpack.c.bf16 %v377, %v375
        %v408 = vpack.c.bf16 %v380, %v378
        %v409 = vpack.c.bf16 %v381, %v379
        %v410 = vpack.c.bf16 %v384, %v382
        %v411 = vpack.c.bf16 %v385, %v383
        %v412 = vpack.c.bf16 %v388, %v386
        %v413 = vpack.c.bf16 %v389, %v387
        %v414 = vpack.c.bf16 %v392, %v390
        %v415 = vpack.c.bf16 %v393, %v391
        %v416 = vpack.c.bf16 %v396, %v394
        %v417 = vpack.c.bf16 %v397, %v395
        %v418 = vpack.c.bf16 %v400, %v398
        %v419 = vpack.c.bf16 %v401, %v399
        %v420 = vpack.c.bf16 %v404, %v402
        %v421 = vpack.c.bf16 %v405, %v403
        %v422 = vld [vmem:[%s1] sm:$0xf]
        %v423 = vld [vmem:[%s1 + $0x4] sm:$0xf]
        %v424 = vld [vmem:[%s1 + $0x8] sm:$0xf]
        %v425 = vld [vmem:[%s1 + $0xc] sm:$0xf]
        %v426 = vld [vmem:[%s1 + $0x10] sm:$0xf]
        %v427 = vld [vmem:[%s1 + $0x14] sm:$0xf]
        %v428 = vld [vmem:[%s1 + $0x18] sm:$0xf]
        %v429 = vld [vmem:[%s1 + $0x1c] sm:$0xf]
        %v430 = vld [vmem:[%s1 + $0x20] sm:$0xf]
        %v431 = vld [vmem:[%s1 + $0x24] sm:$0xf]
        %v432 = vld [vmem:[%s1 + $0x28] sm:$0xf]
        %v433 = vld [vmem:[%s1 + $0x2c] sm:$0xf]
        %v434 = vld [vmem:[%s1 + $0x30] sm:$0xf]
        %v435 = vld [vmem:[%s1 + $0x34] sm:$0xf]
        %v436 = vld [vmem:[%s1 + $0x38] sm:$0xf]
        %v437 = vld [vmem:[%s1 + $0x3c] sm:$0xf]
        %v438 = vld [vmem:[%s2] sm:$0xff]
        %v439 = vld [vmem:[%s2 + $0x8] sm:$0xff]
        %v440 = vld [vmem:[%s2 + $0x10] sm:$0xff]
        %v441 = vld [vmem:[%s2 + $0x18] sm:$0xff]
        %v442 = vld [vmem:[%s2 + $0x20] sm:$0xff]
        %v443 = vld [vmem:[%s2 + $0x28] sm:$0xff]
        %v444 = vld [vmem:[%s2 + $0x30] sm:$0xff]
        %v445 = vld [vmem:[%s2 + $0x38] sm:$0xff]
        %v446 = vld [vmem:[%s2 + $0x40] sm:$0xff]
        %v447 = vld [vmem:[%s2 + $0x48] sm:$0xff]
        %v448 = vld [vmem:[%s2 + $0x50] sm:$0xff]
        %v449 = vld [vmem:[%s2 + $0x58] sm:$0xff]
        %v450 = vld [vmem:[%s2 + $0x60] sm:$0xff]
        %v451 = vld [vmem:[%s2 + $0x68] sm:$0xff]
        %v452 = vld [vmem:[%s2 + $0x70] sm:$0xff]
        %v453 = vld [vmem:[%s2 + $0x78] sm:$0xff]
        %455 = vset.pattern.permute.xlu0 0
        %456 = vperm.xlu0 %455, %v438
        %v457 = vpop.permute.xlu0 %456
        %460 = vset.pattern.permute.xlu0 0
        %461 = vperm.xlu0 %460, %v439
        %v462 = vpop.permute.xlu0 %461
        %465 = vset.pattern.permute.xlu0 0
        %466 = vperm.xlu0 %465, %v440
        %v467 = vpop.permute.xlu0 %466
        %470 = vset.pattern.permute.xlu0 0
        %471 = vperm.xlu0 %470, %v441
        %v472 = vpop.permute.xlu0 %471
        %475 = vset.pattern.permute.xlu0 0
        %476 = vperm.xlu0 %475, %v442
        %v477 = vpop.permute.xlu0 %476
        %480 = vset.pattern.permute.xlu0 0
        %481 = vperm.xlu0 %480, %v443
        %v482 = vpop.permute.xlu0 %481
        %485 = vset.pattern.permute.xlu0 0
        %486 = vperm.xlu0 %485, %v444
        %v487 = vpop.permute.xlu0 %486
        %490 = vset.pattern.permute.xlu0 0
        %491 = vperm.xlu0 %490, %v445
        %v492 = vpop.permute.xlu0 %491
        %495 = vset.pattern.permute.xlu0 0
        %496 = vperm.xlu0 %495, %v446
        %v497 = vpop.permute.xlu0 %496
        %500 = vset.pattern.permute.xlu0 0
        %501 = vperm.xlu0 %500, %v447
        %v502 = vpop.permute.xlu0 %501
        %505 = vset.pattern.permute.xlu0 0
        %506 = vperm.xlu0 %505, %v448
        %v507 = vpop.permute.xlu0 %506
        %510 = vset.pattern.permute.xlu0 0
        %511 = vperm.xlu0 %510, %v449
        %v512 = vpop.permute.xlu0 %511
        %515 = vset.pattern.permute.xlu0 0
        %516 = vperm.xlu0 %515, %v450
        %v517 = vpop.permute.xlu0 %516
        %520 = vset.pattern.permute.xlu0 0
        %521 = vperm.xlu0 %520, %v451
        %v522 = vpop.permute.xlu0 %521
        %525 = vset.pattern.permute.xlu0 0
        %526 = vperm.xlu0 %525, %v452
        %v527 = vpop.permute.xlu0 %526
        %530 = vset.pattern.permute.xlu0 0
        %531 = vperm.xlu0 %530, %v453
        %v532 = vpop.permute.xlu0 %531
        %v550 = vunpack.c.l.b16 %v422
        %v551 = vunpack.c.l.b16 %v423
        %v552 = vunpack.c.l.b16 %v424
        %v553 = vunpack.c.l.b16 %v425
        %v554 = vunpack.c.l.b16 %v426
        %v555 = vunpack.c.l.b16 %v427
        %v556 = vunpack.c.l.b16 %v428
        %v557 = vunpack.c.l.b16 %v429
        %v558 = vunpack.c.l.b16 %v430
        %v559 = vunpack.c.l.b16 %v431
        %v560 = vunpack.c.l.b16 %v432
        %v561 = vunpack.c.l.b16 %v433
        %v562 = vunpack.c.l.b16 %v434
        %v563 = vunpack.c.l.b16 %v435
        %v564 = vunpack.c.l.b16 %v436
        %v565 = vunpack.c.l.b16 %v437
        %v566 = vpack.c.b16 %v551, %v550
        %v567 = vpack.c.b16 %v553, %v552
        %v568 = vpack.c.b16 %v555, %v554
        %v569 = vpack.c.b16 %v557, %v556
        %v570 = vpack.c.b16 %v559, %v558
        %v571 = vpack.c.b16 %v561, %v560
        %v572 = vpack.c.b16 %v563, %v562
        %v573 = vpack.c.b16 %v565, %v564
        %582 = vmatpush.bf16.msra.mxu0 %v420
        %583 = vmatpush.bf16.msra.mxu0 %v418
        %584 = vmatpush.bf16.msra.mxu0 %v416
        %585 = vmatpush.bf16.msra.mxu0 %v414
        %586 = vmatpush.bf16.msra.mxu0 %v412
        %587 = vmatpush.bf16.msra.mxu0 %v410
        %588 = vmatpush.bf16.msra.mxu0 %v408
        %589 = vmatpush.bf16.msra.mxu0 %v406
        %590 = vmatmul.bf16.gmra.mxu0 %v566
        %v591 = vpop.f32.mrf.mxu0
        %v592 = vadd.f32 %v457, %v591
        %v593 = vpop.f32.mrf.mxu0
        %v594 = vadd.f32 %v462, %v593
        %595 = vmatmul.bf16.gmra.mxu0 %v567
        %v596 = vpop.f32.mrf.mxu0
        %v597 = vadd.f32 %v467, %v596
        %v598 = vpop.f32.mrf.mxu0
        %v599 = vadd.f32 %v472, %v598
        %600 = vmatmul.bf16.gmra.mxu0 %v568
        %v601 = vpop.f32.mrf.mxu0
        %v602 = vadd.f32 %v477, %v601
        %v603 = vpop.f32.mrf.mxu0
        %v604 = vadd.f32 %v482, %v603
        %605 = vmatmul.bf16.gmra.mxu0 %v569
        %v606 = vpop.f32.mrf.mxu0
        %v607 = vadd.f32 %v487, %v606
        %v608 = vpop.f32.mrf.mxu0
        %v609 = vadd.f32 %v492, %v608
        %610 = vmatmul.bf16.gmra.mxu0 %v570
        %v611 = vpop.f32.mrf.mxu0
        %v612 = vadd.f32 %v497, %v611
        %v613 = vpop.f32.mrf.mxu0
        %v614 = vadd.f32 %v502, %v613
        %615 = vmatmul.bf16.gmra.mxu0 %v571
        %v616 = vpop.f32.mrf.mxu0
        %v617 = vadd.f32 %v507, %v616
        %v618 = vpop.f32.mrf.mxu0
        %v619 = vadd.f32 %v512, %v618
        %620 = vmatmul.bf16.gmra.mxu0 %v572
        %v621 = vpop.f32.mrf.mxu0
        %v622 = vadd.f32 %v517, %v621
        %v623 = vpop.f32.mrf.mxu0
        %v624 = vadd.f32 %v522, %v623
        %625 = vmatmul.bf16.gmra.mxu0 %v573
        %v626 = vpop.f32.mrf.mxu0
        %v627 = vadd.f32 %v527, %v626
        %v628 = vpop.f32.mrf.mxu0
        %v629 = vadd.f32 %v532, %v628
        %630 = vdwg.mxu0
        %631 = vmatpush.bf16.msra.mxu0 %v421
        %632 = vmatpush.bf16.msra.mxu0 %v419
        %633 = vmatpush.bf16.msra.mxu0 %v417
        %634 = vmatpush.bf16.msra.mxu0 %v415
        %635 = vmatpush.bf16.msra.mxu0 %v413
        %636 = vmatpush.bf16.msra.mxu0 %v411
        %637 = vmatpush.bf16.msra.mxu0 %v409
        %638 = vmatpush.bf16.msra.mxu0 %v407
        %639 = vmatmul.bf16.gmra.mxu0 %v566
        %v640 = vpop.f32.mrf.mxu0
        %v641 = vadd.f32 %v457, %v640
        %v642 = vpop.f32.mrf.mxu0
        %v643 = vadd.f32 %v462, %v642
        %644 = vmatmul.bf16.gmra.mxu0 %v567
        %v645 = vpop.f32.mrf.mxu0
        %v646 = vadd.f32 %v467, %v645
        %v647 = vpop.f32.mrf.mxu0
        %v648 = vadd.f32 %v472, %v647
        %649 = vmatmul.bf16.gmra.mxu0 %v568
        %v650 = vpop.f32.mrf.mxu0
        %v651 = vadd.f32 %v477, %v650
        %v652 = vpop.f32.mrf.mxu0
        %v653 = vadd.f32 %v482, %v652
        %654 = vmatmul.bf16.gmra.mxu0 %v569
        %v655 = vpop.f32.mrf.mxu0
        %v656 = vadd.f32 %v487, %v655
        %v657 = vpop.f32.mrf.mxu0
        %v658 = vadd.f32 %v492, %v657
        %659 = vmatmul.bf16.gmra.mxu0 %v570
        %v660 = vpop.f32.mrf.mxu0
        %v661 = vadd.f32 %v497, %v660
        %v662 = vpop.f32.mrf.mxu0
        %v663 = vadd.f32 %v502, %v662
        %664 = vmatmul.bf16.gmra.mxu0 %v571
        %v665 = vpop.f32.mrf.mxu0
        %v666 = vadd.f32 %v507, %v665
        %v667 = vpop.f32.mrf.mxu0
        %v668 = vadd.f32 %v512, %v667
        %669 = vmatmul.bf16.gmra.mxu0 %v572
        %v670 = vpop.f32.mrf.mxu0
        %v671 = vadd.f32 %v517, %v670
        %v672 = vpop.f32.mrf.mxu0
        %v673 = vadd.f32 %v522, %v672
        %674 = vmatmul.bf16.gmra.mxu0 %v573
        %v675 = vpop.f32.mrf.mxu0
        %v676 = vadd.f32 %v527, %v675
        %v677 = vpop.f32.mrf.mxu0
        %v678 = vadd.f32 %v532, %v677
        %679 = vdwg.mxu0
        %v680 = vmax.f32 %v592, 0.0
        %v681 = vmax.f32 %v641, 0.0
        %v682 = vmax.f32 %v594, 0.0
        %v683 = vmax.f32 %v643, 0.0
        %v684 = vmax.f32 %v597, 0.0
        %v685 = vmax.f32 %v646, 0.0
        %v686 = vmax.f32 %v599, 0.0
        %v687 = vmax.f32 %v648, 0.0
        %v688 = vmax.f32 %v602, 0.0
        %v689 = vmax.f32 %v651, 0.0
        %v690 = vmax.f32 %v604, 0.0
        %v691 = vmax.f32 %v653, 0.0
        %v692 = vmax.f32 %v607, 0.0
        %v693 = vmax.f32 %v656, 0.0
        %v694 = vmax.f32 %v609, 0.0
        %v695 = vmax.f32 %v658, 0.0
        %v696 = vmax.f32 %v612, 0.0
        %v697 = vmax.f32 %v661, 0.0
        %v698 = vmax.f32 %v614, 0.0
        %v699 = vmax.f32 %v663, 0.0
        %v700 = vmax.f32 %v617, 0.0
        %v701 = vmax.f32 %v666, 0.0
        %v702 = vmax.f32 %v619, 0.0
        %v703 = vmax.f32 %v668, 0.0
        %v704 = vmax.f32 %v622, 0.0
        %v705 = vmax.f32 %v671, 0.0
        %v706 = vmax.f32 %v624, 0.0
        %v707 = vmax.f32 %v673, 0.0
        %v708 = vmax.f32 %v627, 0.0
        %v709 = vmax.f32 %v676, 0.0
        %v710 = vmax.f32 %v629, 0.0
        %v711 = vmax.f32 %v678, 0.0
        %v712 = vpack.c.bf16 %v682, %v680
        %v713 = vpack.c.bf16 %v683, %v681
        %v714 = vpack.c.bf16 %v686, %v684
        %v715 = vpack.c.bf16 %v687, %v685
        %v716 = vpack.c.bf16 %v690, %v688
        %v717 = vpack.c.bf16 %v691, %v689
        %v718 = vpack.c.bf16 %v694, %v692
        %v719 = vpack.c.bf16 %v695, %v693
        %v720 = vpack.c.bf16 %v698, %v696
        %v721 = vpack.c.bf16 %v699, %v697
        %v722 = vpack.c.bf16 %v702, %v700
        %v723 = vpack.c.bf16 %v703, %v701
        %v724 = vpack.c.bf16 %v706, %v704
        %v725 = vpack.c.bf16 %v707, %v705
        %v726 = vpack.c.bf16 %v710, %v708
        %v727 = vpack.c.bf16 %v711, %v709
        %v728 = vld [vmem:[%s3] sm:$0xf]
        %v729 = vld [vmem:[%s3 + $0x4] sm:$0xf]
        %v730 = vld [vmem:[%s3 + $0x8] sm:$0xf]
        %v731 = vld [vmem:[%s3 + $0xc] sm:$0xf]
        %v732 = vld [vmem:[%s3 + $0x10] sm:$0xf]
        %v733 = vld [vmem:[%s3 + $0x14] sm:$0xf]
        %v734 = vld [vmem:[%s3 + $0x18] sm:$0xf]
        %v735 = vld [vmem:[%s3 + $0x1c] sm:$0xf]
        %v736 = vld [vmem:[%s4] sm:$0xff]
        %v737 = vld [vmem:[%s4 + $0x8] sm:$0xff]
        %v738 = vld [vmem:[%s4 + $0x10] sm:$0xff]
        %v739 = vld [vmem:[%s4 + $0x18] sm:$0xff]
        %v740 = vld [vmem:[%s4 + $0x20] sm:$0xff]
        %v741 = vld [vmem:[%s4 + $0x28] sm:$0xff]
        %v742 = vld [vmem:[%s4 + $0x30] sm:$0xff]
        %v743 = vld [vmem:[%s4 + $0x38] sm:$0xff]
        %745 = vset.pattern.permute.xlu0 0
        %746 = vperm.xlu0 %745, %v736
        %v747 = vpop.permute.xlu0 %746
        %750 = vset.pattern.permute.xlu0 0
        %751 = vperm.xlu0 %750, %v737
        %v752 = vpop.permute.xlu0 %751
        %755 = vset.pattern.permute.xlu0 0
        %756 = vperm.xlu0 %755, %v738
        %v757 = vpop.permute.xlu0 %756
        %760 = vset.pattern.permute.xlu0 0
        %761 = vperm.xlu0 %760, %v739
        %v762 = vpop.permute.xlu0 %761
        %765 = vset.pattern.permute.xlu0 0
        %766 = vperm.xlu0 %765, %v740
        %v767 = vpop.permute.xlu0 %766
        %770 = vset.pattern.permute.xlu0 0
        %771 = vperm.xlu0 %770, %v741
        %v772 = vpop.permute.xlu0 %771
        %775 = vset.pattern.permute.xlu0 0
        %776 = vperm.xlu0 %775, %v742
        %v777 = vpop.permute.xlu0 %776
        %780 = vset.pattern.permute.xlu0 0
        %781 = vperm.xlu0 %780, %v743
        %v782 = vpop.permute.xlu0 %781
        %v792 = vunpack.c.l.b16 %v728
        %v793 = vunpack.c.l.b16 %v729
        %v794 = vunpack.c.l.b16 %v730
        %v795 = vunpack.c.l.b16 %v731
        %v796 = vunpack.c.l.b16 %v732
        %v797 = vunpack.c.l.b16 %v733
        %v798 = vunpack.c.l.b16 %v734
        %v799 = vunpack.c.l.b16 %v735
        %v800 = vpack.c.b16 %v793, %v792
        %v801 = vpack.c.b16 %v795, %v794
        %v802 = vpack.c.b16 %v797, %v796
        %v803 = vpack.c.b16 %v799, %v798
        %808 = vmatpush.bf16.msra.mxu0 %v726
        %809 = vmatpush.bf16.msra.mxu0 %v724
        %810 = vmatpush.bf16.msra.mxu0 %v722
        %811 = vmatpush.bf16.msra.mxu0 %v720
        %812 = vmatpush.bf16.msra.mxu0 %v718
        %813 = vmatpush.bf16.msra.mxu0 %v716
        %814 = vmatpush.bf16.msra.mxu0 %v714
        %815 = vmatpush.bf16.msra.mxu0 %v712
        %816 = vmatmul.bf16.gmra.mxu0 %v800
        %v817 = vpop.f32.mrf.mxu0
        %v818 = vadd.f32 %v747, %v817
        %v819 = vpop.f32.mrf.mxu0
        %v820 = vadd.f32 %v752, %v819
        %821 = vmatmul.bf16.gmra.mxu0 %v801
        %v822 = vpop.f32.mrf.mxu0
        %v823 = vadd.f32 %v757, %v822
        %v824 = vpop.f32.mrf.mxu0
        %v825 = vadd.f32 %v762, %v824
        %826 = vmatmul.bf16.gmra.mxu0 %v802
        %v827 = vpop.f32.mrf.mxu0
        %v828 = vadd.f32 %v767, %v827
        %v829 = vpop.f32.mrf.mxu0
        %v830 = vadd.f32 %v772, %v829
        %831 = vmatmul.bf16.gmra.mxu0 %v803
        %v832 = vpop.f32.mrf.mxu0
        %v833 = vadd.f32 %v777, %v832
        %v834 = vpop.f32.mrf.mxu0
        %v835 = vadd.f32 %v782, %v834
        %836 = vdwg.mxu0
        %837 = vmatpush.bf16.msra.mxu0 %v727
        %838 = vmatpush.bf16.msra.mxu0 %v725
        %839 = vmatpush.bf16.msra.mxu0 %v723
        %840 = vmatpush.bf16.msra.mxu0 %v721
        %841 = vmatpush.bf16.msra.mxu0 %v719
        %842 = vmatpush.bf16.msra.mxu0 %v717
        %843 = vmatpush.bf16.msra.mxu0 %v715
        %844 = vmatpush.bf16.msra.mxu0 %v713
        %845 = vmatmul.bf16.gmra.mxu0 %v800
        %v846 = vpop.f32.mrf.mxu0
        %v847 = vadd.f32 %v747, %v846
        %v848 = vpop.f32.mrf.mxu0
        %v849 = vadd.f32 %v752, %v848
        %850 = vmatmul.bf16.gmra.mxu0 %v801
        %v851 = vpop.f32.mrf.mxu0
        %v852 = vadd.f32 %v757, %v851
        %v853 = vpop.f32.mrf.mxu0
        %v854 = vadd.f32 %v762, %v853
        %855 = vmatmul.bf16.gmra.mxu0 %v802
        %v856 = vpop.f32.mrf.mxu0
        %v857 = vadd.f32 %v767, %v856
        %v858 = vpop.f32.mrf.mxu0
        %v859 = vadd.f32 %v772, %v858
        %860 = vmatmul.bf16.gmra.mxu0 %v803
        %v861 = vpop.f32.mrf.mxu0
        %v862 = vadd.f32 %v777, %v861
        %v863 = vpop.f32.mrf.mxu0
        %v864 = vadd.f32 %v782, %v863
        %865 = vdwg.mxu0
        %v866 = vmax.f32 %v818, 0.0
        %v867 = vmax.f32 %v847, 0.0
        %v868 = vmax.f32 %v820, 0.0
        %v869 = vmax.f32 %v849, 0.0
        %v870 = vmax.f32 %v823, 0.0
        %v871 = vmax.f32 %v852, 0.0
        %v872 = vmax.f32 %v825, 0.0
        %v873 = vmax.f32 %v854, 0.0
        %v874 = vmax.f32 %v828, 0.0
        %v875 = vmax.f32 %v857, 0.0
        %v876 = vmax.f32 %v830, 0.0
        %v877 = vmax.f32 %v859, 0.0
        %v878 = vmax.f32 %v833, 0.0
        %v879 = vmax.f32 %v862, 0.0
        %v880 = vmax.f32 %v835, 0.0
        %v881 = vmax.f32 %v864, 0.0
        %v882 = vpack.c.bf16 %v868, %v866
        %v883 = vpack.c.bf16 %v869, %v867
        %v884 = vpack.c.bf16 %v872, %v870
        %v885 = vpack.c.bf16 %v873, %v871
        %v886 = vpack.c.bf16 %v876, %v874
        %v887 = vpack.c.bf16 %v877, %v875
        %v888 = vpack.c.bf16 %v880, %v878
        %v889 = vpack.c.bf16 %v881, %v879
        %v890 = vld [vmem:[%s5] sm:$0xf]
        %v891 = vld [vmem:[%s5 + $0x4] sm:$0xf]
        %v892 = vld [vmem:[%s5 + $0x8] sm:$0xf]
        %v893 = vld [vmem:[%s5 + $0xc] sm:$0xf]
        %v894 = vld [vmem:[%s6] sm:$0xff]
        %v895 = vld [vmem:[%s6 + $0x8] sm:$0xff]
        %v896 = vld [vmem:[%s6 + $0x10] sm:$0xff]
        %v897 = vld [vmem:[%s6 + $0x18] sm:$0xff]
        %899 = vset.pattern.permute.xlu0 0
        %900 = vperm.xlu0 %899, %v894
        %v901 = vpop.permute.xlu0 %900
        %904 = vset.pattern.permute.xlu0 0
        %905 = vperm.xlu0 %904, %v895
        %v906 = vpop.permute.xlu0 %905
        %909 = vset.pattern.permute.xlu0 0
        %910 = vperm.xlu0 %909, %v896
        %v911 = vpop.permute.xlu0 %910
        %914 = vset.pattern.permute.xlu0 0
        %915 = vperm.xlu0 %914, %v897
        %v916 = vpop.permute.xlu0 %915
        %v922 = vunpack.c.l.b16 %v890
        %v923 = vunpack.c.l.b16 %v891
        %v924 = vunpack.c.l.b16 %v892
        %v925 = vunpack.c.l.b16 %v893
        %v926 = vpack.c.b16 %v923, %v922
        %v927 = vpack.c.b16 %v925, %v924
        %vm928 = vcmask 523264
        %v930 = vsel %vm928, %v926, 0
        %v933 = vsel %vm928, %v927, 0
        %935 = vmatpush.bf16.msra.mxu0 0
        %936 = vmatpush.bf16.msra.mxu0 0
        %937 = vmatpush.bf16.msra.mxu0 0
        %938 = vmatpush.bf16.msra.mxu0 0
        %939 = vmatpush.bf16.msra.mxu0 %v888
        %940 = vmatpush.bf16.msra.mxu0 %v886
        %941 = vmatpush.bf16.msra.mxu0 %v884
        %942 = vmatpush.bf16.msra.mxu0 %v882
        %943 = vmatmul.bf16.gmra.mxu0 %v930
        %v944 = vpop.f32.mrf.mxu0
        %v945 = vadd.f32 %v901, %v944
        %v946 = vpop.f32.mrf.mxu0
        %v947 = vadd.f32 %v906, %v946
        %948 = vmatmul.bf16.gmra.mxu0 %v933
        %v949 = vpop.f32.mrf.mxu0
        %v950 = vadd.f32 %v911, %v949
        %v951 = vpop.f32.mrf.mxu0
        %v952 = vadd.f32 %v916, %v951
        %953 = vdwg.mxu0
        %954 = vmatpush.bf16.msra.mxu0 0
        %955 = vmatpush.bf16.msra.mxu0 0
        %956 = vmatpush.bf16.msra.mxu0 0
        %957 = vmatpush.bf16.msra.mxu0 0
        %958 = vmatpush.bf16.msra.mxu0 %v889
        %959 = vmatpush.bf16.msra.mxu0 %v887
        %960 = vmatpush.bf16.msra.mxu0 %v885
        %961 = vmatpush.bf16.msra.mxu0 %v883
        %962 = vmatmul.bf16.gmra.mxu0 %v930
        %v963 = vpop.f32.mrf.mxu0
        %v964 = vadd.f32 %v901, %v963
        %v965 = vpop.f32.mrf.mxu0
        %v966 = vadd.f32 %v906, %v965
        %967 = vmatmul.bf16.gmra.mxu0 %v933
        %v968 = vpop.f32.mrf.mxu0
        %v969 = vadd.f32 %v911, %v968
        %v970 = vpop.f32.mrf.mxu0
        %v971 = vadd.f32 %v916, %v970
        %972 = vdwg.mxu0
        %v973 = vmax.f32 %v945, 0.0
        %v974 = vmax.f32 %v964, 0.0
        %v975 = vmax.f32 %v947, 0.0
        %v976 = vmax.f32 %v966, 0.0
        %v977 = vmax.f32 %v950, 0.0
        %v978 = vmax.f32 %v969, 0.0
        %v979 = vmax.f32 %v952, 0.0
        %v980 = vmax.f32 %v971, 0.0
        %v981 = vpack.c.bf16 %v975, %v973
        %v982 = vpack.c.bf16 %v976, %v974
        %v983 = vpack.c.bf16 %v979, %v977
        %v984 = vpack.c.bf16 %v980, %v978
        %v985 = vld [vmem:[%s7] sm:$0x1]
        %v986 = vld [vmem:[%s8] sm:$0x3]
        %988 = vset.pattern.permute.xlu0 0
        %989 = vperm.xlu0 %988, %v986
        %v990 = vpop.permute.xlu0 %989
        %vm992 = vcmask 261120
        %v994 = vsel %vm992, %v985, 0
        %996 = vmatpush.bf16.msra.mxu0 0
        %997 = vmatpush.bf16.msra.mxu0 0
        %998 = vmatpush.bf16.msra.mxu0 0
        %999 = vmatpush.bf16.msra.mxu0 0
        %1000 = vmatpush.bf16.msra.mxu0 0
        %1001 = vmatpush.bf16.msra.mxu0 0
        %1002 = vmatpush.bf16.msra.mxu0 %v983
        %1003 = vmatpush.bf16.msra.mxu0 %v981
        %1004 = vmatmul.bf16.gmra.mxu0 %v994
        %v1005 = vpop.f32.mrf.mxu0
        %v1006 = vadd.f32 %v990, %v1005
        %v1007 = vpop.f32.mrf.mxu0
        %1008 = vdwg.mxu0
        %1009 = vmatpush.bf16.msra.mxu0 0
        %1010 = vmatpush.bf16.msra.mxu0 0
        %1011 = vmatpush.bf16.msra.mxu0 0
        %1012 = vmatpush.bf16.msra.mxu0 0
        %1013 = vmatpush.bf16.msra.mxu0 0
        %1014 = vmatpush.bf16.msra.mxu0 0
        %1015 = vmatpush.bf16.msra.mxu0 %v984
        %1016 = vmatpush.bf16.msra.mxu0 %v982
        %1017 = vmatmul.bf16.gmra.mxu0 %v994
        %v1018 = vpop.f32.mrf.mxu0
        %v1019 = vadd.f32 %v990, %v1018
        %v1020 = vpop.f32.mrf.mxu0
        %1021 = vdwg.mxu0
        %v1022 = vtanh.pop %v1006
        %v1023 = vtanh.pop %v1019
        %v1024 = vmul.f32 %v1022, 0.5
        %v1025 = vmul.f32 %v1023, 0.5
        %v1028 = vrot.slane %v1025, 6
        %vm1029 = vcmask 1041408
        %v1030 = vsel %vm1029, %v1024, %v1028
        %1032 = vst [vmem:[%s370] sm:$0xf] %v1030
        %s1033 = sand.u32 %s244, 1
        %s1034 = scalar_lea.sflag [#allocation4], %s1033
        %s1035 = sand.u32 %s244, 1
        %s1036 = smul.addr %s1035, 4
        %s1037 = scalar_lea.vmem [#allocation5], %s1036
        // Predicated region
        $region61: #{mlp_adj_forward.1} parent=55 // pred_check
          %p1038 = pneg %p254
        $region62: #{mlp_adj_forward.1} parent=55 // pred_check_branch
          %1040 = sbr.rel (%p1038) target = $region64
        $region63: #{mlp_adj_forward.1} parent=55 // pred_region
          %s1041 = smul.u32 2, %s31
          %1043 = vsyncadd %s1034, 0
          %s1044 = smul.addr %s30, 2
          %s1045 = sadd.s32 %s1041, %s1044
          %s1046 = smul.addr %s1045, 2
          %s1047 = scalar_lea.hbm %s9, %s1046
          %s1049 = sshll.u32 %s1037, 4
          %s1050 = int_to_ptr.vmem [resolvable:$true] %s1049
          %s1051 = sshll.u32 %s1047, 4
          %s1052 = int_to_ptr.hbm [resolvable:$true] %s1051
          %1054 = dma.vmem_to_hbm [thread:$0]  %s1050, 64, %s1052, %s1034
        $region64: #{mlp_adj_forward.1} parent=55 // pred_fallthru
          _
      $region56: #{mlp_adj_forward.1} parent=5 // pred_fallthru
        _
      %p1055 = scmp.le.s32.totalorder 2, %s21
      // Predicated region
      $region65: #{mlp_adj_forward.1} parent=5 // pred_check
        %p1056 = pneg %p1055
      $region66: #{mlp_adj_forward.1} parent=5 // pred_check_branch
        %1058 = sbr.rel (%p1056) target = $region68
      $region67: #{mlp_adj_forward.1} parent=5 // pred_region
        %s1059 = ssub.s32 %s21, 2
        // Predicated region
        $region69: #{mlp_adj_forward.1} parent=67 // pred_check
          %p1060 = pneg %p260
        $region70: #{mlp_adj_forward.1} parent=67 // pred_check_branch
          %1062 = sbr.rel (%p1060) target = $region72
        $region71: #{mlp_adj_forward.1} parent=67 // pred_region
          %s1063 = sand.u32 %s245, 1
          %s1064 = scalar_lea.sflag [#allocation4], %s1063
          %s1065 = sand.u32 %s245, 1
          %s1066 = smul.addr %s1065, 4
          %s1067 = scalar_lea.vmem [#allocation5], %s1066
          %1069 = dma.done %s1064, 64
        $region72: #{mlp_adj_forward.1} parent=67 // pred_fallthru
          _
      $region68: #{mlp_adj_forward.1} parent=5 // pred_fallthru
        _
    $region6: #{mlp_adj_forward.1} parent=1 // loop_footer
      %s25 = sadd.s32 1, %s21
    $region7: #{mlp_adj_forward.1} parent=1 // loop_footer_branch
      %20 = sbr.rel target = $region3
    $region8: #{mlp_adj_forward.1} parent=1 // loop_exit
      _
    %1070 = vsyncpa [#allocation3], 1
    %s1071 = scalar_lea.sflag [#allocation3], 1
    %1072 = vsyncpa %s1071, 1
    %1073 = vsyncpa [#allocation4], 1
    %s1074 = scalar_lea.sflag [#allocation4], 1
    %1075 = vsyncpa %s1074, 1

</llo_original>
